<compile_context>
chip_gen: v7x
topology: tpu7x:2x2x1
jax: 0.10.0
libtpu: 0.0.40
codegen_flags: <defaults>
</compile_context>

<pallas_src>
import jax
import jax.numpy as jnp
from jax.experimental import pallas as pl
from jax.experimental.pallas import tpu as pltpu

BN_EPS = 1e-5


# ---------------------------------------------------------------- helpers ---
def _round_up(x, m):
    return ((x + m - 1) // m) * m


def _extract_patches_t(x_cnhw, ksize=3, stride=2, pad=1):
    """im2col in transposed layout (glue only): (C,N,H,W) -> (k*k*C, N*Ho*Wo)."""
    C, N, H, W = x_cnhw.shape
    xp = jnp.pad(x_cnhw, ((0, 0), (0, 0), (pad, pad), (pad, pad)))
    Ho = (H + 2 * pad - ksize) // stride + 1
    Wo = (W + 2 * pad - ksize) // stride + 1
    taps = []
    for ky in range(ksize):
        for kx in range(ksize):
            taps.append(xp[:, :, ky:ky + stride * Ho:stride, kx:kx + stride * Wo:stride])
    p = jnp.stack(taps, axis=0)                       # (9, C, N, Ho, Wo), row = k*C + c
    return p.reshape(ksize * ksize * C, N * Ho * Wo), (N, Ho, Wo)


# ---------------------------------------------------------- Pallas kernel ---
def _matmul_bias_relu_kernel(w_ref, b_ref, p_ref, o_ref):
    # w: (Cout, K)  b: (Cout, 1)  p: (K, TILE_M)  o: (Cout, TILE_M)
    acc = jnp.dot(w_ref[...], p_ref[...], preferred_element_type=jnp.float32)
    o_ref[...] = jnp.maximum(acc + b_ref[...], 0.0).astype(o_ref.dtype)


def matmul_bias_relu_t(w_t, bias, p_t, tile_m=512):
    """Y^T = relu(W^T @ P^T + b), gridded over the lane-dense M axis."""
    Cout, K = w_t.shape
    _, M = p_t.shape

    # Lane-dense tile, >= 128, clamped so it never exceeds the (padded) problem
    # and always fits comfortably in double-buffered VMEM (even on v7x, 64 MiB).
    tile_m = max(128, min(tile_m, pl.cdiv(M, 128) * 128))
    per_tile_bytes = 4 * tile_m * (K + Cout) * 2      # in + out tiles, double-buffered
    while tile_m > 128 and per_tile_bytes > (8 << 20):
        tile_m //= 2
        per_tile_bytes //= 2

    m_pad = _round_up(M, tile_m)
    if m_pad != M:
        p_t = jnp.pad(p_t, ((0, 0), (0, m_pad - M)))
    grid = (m_pad // tile_m,)

    out = pl.pallas_call(
        _matmul_bias_relu_kernel,
        out_shape=jax.ShapeDtypeStruct((Cout, m_pad), jnp.float32),
        grid_spec=pltpu.PrefetchScalarGridSpec(
            num_scalar_prefetch=0,
            grid=grid,
            in_specs=[
                pl.BlockSpec((Cout, K), lambda i: (0, 0)),        # weights: VMEM-resident
                pl.BlockSpec((Cout, 1), lambda i: (0, 0)),        # bias:    VMEM-resident
                pl.BlockSpec((K, tile_m), lambda i: (0, i)),      # patch tile (lane-dense)
            ],
            out_specs=pl.BlockSpec((Cout, tile_m), lambda i: (0, i)),
        ),
        compiler_params=pltpu.CompilerParams(
            dimension_semantics=("parallel",),        # shard M across TCs (v7x megacore)
            vmem_limit_bytes=32 * 1024 * 1024,        # explicit, v7x(64 MiB)-safe
        ),
    )(w_t, bias, p_t)
    return out[:, :M]


# ---------------------------------------------------------------- params ----
def init_params(key, in_channels):
    ks = jax.random.split(key, 10)

    def conv_w(k, shape):
        return jax.random.normal(k, shape, jnp.float32) * 0.1

    def bn(k, c):
        k1, k2, k3, k4 = jax.random.split(k, 4)
        gamma = jax.random.uniform(k1, (c,), jnp.float32, 0.5, 1.5)
        beta = jax.random.normal(k2, (c,), jnp.float32) * 0.1
        mean = jax.random.normal(k3, (c,), jnp.float32) * 0.1
        var = jax.random.uniform(k4, (c,), jnp.float32, 0.5, 1.5)
        scale = gamma / jnp.sqrt(var + BN_EPS)
        bias = beta - mean * scale
        return scale, bias

    p = {}
    # raw PyTorch-shaped weights (kept for the pure-JAX reference check)
    p['raw_conv1'] = conv_w(ks[0], (32, in_channels, 3, 3))
    p['raw_dw1'] = conv_w(ks[2], (32, 1, 3, 3))
    p['raw_pw1'] = conv_w(ks[4], (48, 32, 1, 1))
    p['raw_dw2'] = conv_w(ks[6], (48, 1, 3, 3))
    p['raw_pw2'] = conv_w(ks[8], (64, 48, 1, 1))

    s1, b1 = bn(ks[1], 32)
    ds1, db1 = bn(ks[3], 32)
    ps1, pb1 = bn(ks[5], 48)
    ds2, db2 = bn(ks[7], 48)
    ps2, pb2 = bn(ks[9], 64)
    p['bn'] = dict(conv1=(s1, b1), dw1=(ds1, db1), pw1=(ps1, pb1),
                   dw2=(ds2, db2), pw2=(ps2, pb2))

    # --- stage 1: dense 3x3 s2 conv, BN scale/shift folded ------------------
    # row layout of im2col patches is (ky*3+kx)*Cin + cin
    w1 = jnp.transpose(p['raw_conv1'], (2, 3, 1, 0)).reshape(9 * in_channels, 32)
    p['w1_t'] = jnp.transpose(w1 * s1[None, :])                    # (32, 9*Cin)
    p['b1'] = b1.reshape(32, 1)

    # --- stages 2/3: fold depthwise conv + BN into the pointwise matmul -----
    def fold_sep(raw_dw, dw_s, dw_b, raw_pw, pw_s, pw_b):
        C = raw_dw.shape[0]
        Cout = raw_pw.shape[0]
        dww = jnp.transpose(raw_dw[:, 0], (1, 2, 0)).reshape(9, C)     # (9, C)
        pww = jnp.transpose(raw_pw[:, :, 0, 0], (1, 0))                # (C, Cout)
        a = dww * dw_s[None, :]                                        # dw * bn1-scale
        wp = pww * pw_s[None, :]                                       # pw * bn2-scale
        w_eff = (a[:, :, None] * wp[None, :, :]).reshape(9 * C, Cout)  # row = k*C+c
        b_eff = pw_s * (dw_b @ pww) + pw_b
        return jnp.transpose(w_eff), b_eff.reshape(Cout, 1)

    p['w2_t'], p['b2'] = fold_sep(p['raw_dw1'], ds1, db1, p['raw_pw1'], ps1, pb1)
    p['w3_t'], p['b3'] = fold_sep(p['raw_dw2'], ds2, db2, p['raw_pw2'], ps2, pb2)
    return p


# --------------------------------------------------------------- forward ----
def learning_to_downsample(x_nchw, p, compute_dtype=jnp.float32, tile_m=512):
    # NCHW -> (C, N, H, W): channels on sublanes, pixels (M) on lanes throughout.
    x = jnp.transpose(x_nchw, (1, 0, 2, 3)).astype(jnp.float32)

    stages = ((p['w1_t'], p['b1'], 32),
              (p['w2_t'], p['b2'], 48),
              (p['w3_t'], p['b3'], 64))
    for w_t, b, cout in stages:
        patches, (N, Ho, Wo) = _extract_patches_t(x)
        y = matmul_bias_relu_t(w_t.astype(compute_dtype), b,
                               patches.astype(compute_dtype), tile_m=tile_m)
        x = y.reshape(cout, N, Ho, Wo)

    return jnp.transpose(x, (1, 0, 2, 3))             # (C,N,H,W) -> NCHW


# ------------------------------------------------------- pure-JAX reference -
def _reference(x_nchw, p):
    dn = ('NHWC', 'HWIO', 'NHWC')
    x = jnp.transpose(x_nchw, (0, 2, 3, 1)).astype(jnp.float32)

    def conv(x, w_oihw, stride, groups=1, pad=1):
        w = jnp.transpose(w_oihw, (2, 3, 1, 0))       # OIHW -> HWIO
        return jax.lax.conv_general_dilated(
            x, w, (stride, stride), [(pad, pad), (pad, pad)],
            dimension_numbers=dn, feature_group_count=groups)

    def affine(x, sb):
        s, b = sb
        return x * s + b

    bn = p['bn']
    x = jnp.maximum(affine(conv(x, p['raw_conv1'], 2), bn['conv1']), 0.0)
    x = affine(conv(x, p['raw_dw1'], 2, groups=32), bn['dw1'])
    x = jnp.maximum(affine(conv(x, p['raw_pw1'], 1, pad=0), bn['pw1']), 0.0)
    x = affine(conv(x, p['raw_dw2'], 2, groups=48), bn['dw2'])
    x = jnp.maximum(affine(conv(x, p['raw_pw2'], 1, pad=0), bn['pw2']), 0.0)
    return jnp.transpose(x, (0, 3, 1, 2))


if __name__ == "__main__":
    key = jax.random.PRNGKey(0)
    kx, kp = jax.random.split(key)
    N, Cin, H, W = 2, 4, 16, 16
    x = jax.random.normal(kx, (N, Cin, H, W), jnp.float32)
    params = init_params(kp, Cin)

    out = jax.block_until_ready(jax.jit(learning_to_downsample)(x, params))
    assert out.shape == (N, 64, H // 8, W // 8), out.shape

    ref = jax.block_until_ready(_reference(x, params))
    max_err = float(jnp.max(jnp.abs(out - ref)))
    assert jnp.allclose(out, ref, atol=2e-4, rtol=2e-4), max_err

    print("KERNEL_OK")
</pallas_src>

<mosaic_0001>
module attributes {stable_mosaic.version = 11 : i64} {
  func.func @_matmul_bias_relu_kernel(%arg0: i32, %arg1: memref<32x36xf32, #tpu.memory_space<vmem>>, %arg2: memref<32x1xf32, #tpu.memory_space<vmem>>, %arg3: memref<36x128xf32, #tpu.memory_space<vmem>>, %arg4: memref<32x128xf32, #tpu.memory_space<vmem>>) attributes {dimension_semantics = [#tpu.dimension_semantics<parallel>], iteration_bounds = array<i64: 1>, scalar_prefetch = 0 : i64, scratch_operands = 0 : i64, tpu.core_type = #tpu.core_type<tc>, window_params = [{pipeline_mode = #tpu.pipeline_mode<synchronous>, transform_indices = @transform_0, window_bounds = array<i64: 32, 36>}, {pipeline_mode = #tpu.pipeline_mode<synchronous>, transform_indices = @transform_1, window_bounds = array<i64: 32, 1>}, {transform_indices = @transform_2, window_bounds = array<i64: 36, 128>}, {transform_indices = @transform_3, window_bounds = array<i64: 32, 128>}]} {
    %c0 = arith.constant 0 : index
    %c0_0 = arith.constant 0 : index
    %0 = vector.load %arg1[%c0, %c0_0] : memref<32x36xf32, #tpu.memory_space<vmem>>, vector<32x36xf32>
    %c0_1 = arith.constant 0 : index
    %c0_2 = arith.constant 0 : index
    %1 = vector.load %arg3[%c0_1, %c0_2] : memref<36x128xf32, #tpu.memory_space<vmem>>, vector<36x128xf32>
    %cst = arith.constant dense<0.000000e+00> : vector<32x128xf32>
    %2 = tpu.matmul %0, %1, %cst {dimension_numbers = #tpu.dot_dimension_numbers<[1], [0], [0], [1], [0, 0, 1, 1], [], []>} : vector<32x36xf32>, vector<36x128xf32>, vector<32x128xf32> -> vector<32x128xf32>
    %c0_3 = arith.constant 0 : index
    %c0_4 = arith.constant 0 : index
    %3 = vector.load %arg2[%c0_3, %c0_4] : memref<32x1xf32, #tpu.memory_space<vmem>>, vector<32x1xf32>
    %4 = vector.broadcast %3 : vector<32x1xf32> to vector<32x128xf32>
    %5 = arith.addf %2, %4 : vector<32x128xf32>
    %cst_5 = arith.constant 0.000000e+00 : f32
    %6 = vector.broadcast %cst_5 : f32 to vector<32x128xf32>
    %7 = arith.maximumf %5, %6 : vector<32x128xf32>
    %c0_6 = arith.constant 0 : index
    %c0_7 = arith.constant 0 : index
    %8 = vector.load %arg4[%c0_6, %c0_7] : memref<32x128xf32, #tpu.memory_space<vmem>>, vector<32x128xf32>
    tpu.vector_store %arg4[%c0_6, %c0_7], %7 {strides = array<i32>} : memref<32x128xf32, #tpu.memory_space<vmem>>, vector<32x128xf32>,
    return
  }
  func.func @transform_0(%arg0: i32) -> (i32, i32) {
    %c0_i32 = arith.constant 0 : i32
    %c0_i32_0 = arith.constant 0 : i32
    %c0_i32_1 = arith.constant 0 : i32
    return %c0_i32, %c0_i32_0 : i32, i32
  }
  func.func @transform_1(%arg0: i32) -> (i32, i32) {
    %c0_i32 = arith.constant 0 : i32
    %c0_i32_0 = arith.constant 0 : i32
    %c0_i32_1 = arith.constant 0 : i32
    return %c0_i32, %c0_i32_0 : i32, i32
  }
  func.func @transform_2(%arg0: i32) -> (i32, i32) {
    %c0_i32 = arith.constant 0 : i32
    %c0_i32_0 = arith.constant 0 : i32
    return %c0_i32, %arg0 : i32, i32
  }
  func.func @transform_3(%arg0: i32) -> (i32, i32) {
    %c0_i32 = arith.constant 0 : i32
    %c0_i32_0 = arith.constant 0 : i32
    return %c0_i32, %arg0 : i32, i32
  }
}

module attributes {stable_mosaic.version = 11 : i64} {
  func.func @_matmul_bias_relu_kernel(%arg0: i32, %arg1: memref<48x288xf32, #tpu.memory_space<vmem>>, %arg2: memref<48x1xf32, #tpu.memory_space<vmem>>, %arg3: memref<288x128xf32, #tpu.memory_space<vmem>>, %arg4: memref<48x128xf32, #tpu.memory_space<vmem>>) attributes {dimension_semantics = [#tpu.dimension_semantics<parallel>], iteration_bounds = array<i64: 1>, scalar_prefetch = 0 : i64, scratch_operands = 0 : i64, tpu.core_type = #tpu.core_type<tc>, window_params = [{pipeline_mode = #tpu.pipeline_mode<synchronous>, transform_indices = @transform_0, window_bounds = array<i64: 48, 288>}, {pipeline_mode = #tpu.pipeline_mode<synchronous>, transform_indices = @transform_1, window_bounds = array<i64: 48, 1>}, {transform_indices = @transform_2, window_bounds = array<i64: 288, 128>}, {transform_indices = @transform_3, window_bounds = array<i64: 48, 128>}]} {
    %c0 = arith.constant 0 : index
    %c0_0 = arith.constant 0 : index
    %0 = vector.load %arg1[%c0, %c0_0] : memref<48x288xf32, #tpu.memory_space<vmem>>, vector<48x288xf32>
    %c0_1 = arith.constant 0 : index
    %c0_2 = arith.constant 0 : index
    %1 = vector.load %arg3[%c0_1, %c0_2] : memref<288x128xf32, #tpu.memory_space<vmem>>, vector<288x128xf32>
    %cst = arith.constant dense<0.000000e+00> : vector<48x128xf32>
    %2 = tpu.matmul %0, %1, %cst {dimension_numbers = #tpu.dot_dimension_numbers<[1], [0], [0], [1], [0, 0, 1, 1], [], []>} : vector<48x288xf32>, vector<288x128xf32>, vector<48x128xf32> -> vector<48x128xf32>
    %c0_3 = arith.constant 0 : index
    %c0_4 = arith.constant 0 : index
    %3 = vector.load %arg2[%c0_3, %c0_4] : memref<48x1xf32, #tpu.memory_space<vmem>>, vector<48x1xf32>
    %4 = vector.broadcast %3 : vector<48x1xf32> to vector<48x128xf32>
    %5 = arith.addf %2, %4 : vector<48x128xf32>
    %cst_5 = arith.constant 0.000000e+00 : f32
    %6 = vector.broadcast %cst_5 : f32 to vector<48x128xf32>
    %7 = arith.maximumf %5, %6 : vector<48x128xf32>
    %c0_6 = arith.constant 0 : index
    %c0_7 = arith.constant 0 : index
    %8 = vector.load %arg4[%c0_6, %c0_7] : memref<48x128xf32, #tpu.memory_space<vmem>>, vector<48x128xf32>
    tpu.vector_store %arg4[%c0_6, %c0_7], %7 {strides = array<i32>} : memref<48x128xf32, #tpu.memory_space<vmem>>, vector<48x128xf32>,
    return
  }
  func.func @transform_0(%arg0: i32) -> (i32, i32) {
    %c0_i32 = arith.constant 0 : i32
    %c0_i32_0 = arith.constant 0 : i32
    %c0_i32_1 = arith.constant 0 : i32
    return %c0_i32, %c0_i32_0 : i32, i32
  }
  func.func @transform_1(%arg0: i32) -> (i32, i32) {
    %c0_i32 = arith.constant 0 : i32
    %c0_i32_0 = arith.constant 0 : i32
    %c0_i32_1 = arith.constant 0 : i32
    return %c0_i32, %c0_i32_0 : i32, i32
  }
  func.func @transform_2(%arg0: i32) -> (i32, i32) {
    %c0_i32 = arith.constant 0 : i32
    %c0_i32_0 = arith.constant 0 : i32
    return %c0_i32, %arg0 : i32, i32
  }
  func.func @transform_3(%arg0: i32) -> (i32, i32) {
    %c0_i32 = arith.constant 0 : i32
    %c0_i32_0 = arith.constant 0 : i32
    return %c0_i32, %arg0 : i32, i32
  }
}

module attributes {stable_mosaic.version = 11 : i64} {
  func.func @_matmul_bias_relu_kernel(%arg0: i32, %arg1: memref<64x432xf32, #tpu.memory_space<vmem>>, %arg2: memref<64x1xf32, #tpu.memory_space<vmem>>, %arg3: memref<432x128xf32, #tpu.memory_space<vmem>>, %arg4: memref<64x128xf32, #tpu.memory_space<vmem>>) attributes {dimension_semantics = [#tpu.dimension_semantics<parallel>], iteration_bounds = array<i64: 1>, scalar_prefetch = 0 : i64, scratch_operands = 0 : i64, tpu.core_type = #tpu.core_type<tc>, window_params = [{pipeline_mode = #tpu.pipeline_mode<synchronous>, transform_indices = @transform_0, window_bounds = array<i64: 64, 432>}, {pipeline_mode = #tpu.pipeline_mode<synchronous>, transform_indices = @transform_1, window_bounds = array<i64: 64, 1>}, {transform_indices = @transform_2, window_bounds = array<i64: 432, 128>}, {transform_indices = @transform_3, window_bounds = array<i64: 64, 128>}]} {
    %c0 = arith.constant 0 : index
    %c0_0 = arith.constant 0 : index
    %0 = vector.load %arg1[%c0, %c0_0] : memref<64x432xf32, #tpu.memory_space<vmem>>, vector<64x432xf32>
    %c0_1 = arith.constant 0 : index
    %c0_2 = arith.constant 0 : index
    %1 = vector.load %arg3[%c0_1, %c0_2] : memref<432x128xf32, #tpu.memory_space<vmem>>, vector<432x128xf32>
    %cst = arith.constant dense<0.000000e+00> : vector<64x128xf32>
    %2 = tpu.matmul %0, %1, %cst {dimension_numbers = #tpu.dot_dimension_numbers<[1], [0], [0], [1], [0, 0, 1, 1], [], []>} : vector<64x432xf32>, vector<432x128xf32>, vector<64x128xf32> -> vector<64x128xf32>
    %c0_3 = arith.constant 0 : index
    %c0_4 = arith.constant 0 : index
    %3 = vector.load %arg2[%c0_3, %c0_4] : memref<64x1xf32, #tpu.memory_space<vmem>>, vector<64x1xf32>
    %4 = vector.broadcast %3 : vector<64x1xf32> to vector<64x128xf32>
    %5 = arith.addf %2, %4 : vector<64x128xf32>
    %cst_5 = arith.constant 0.000000e+00 : f32
    %6 = vector.broadcast %cst_5 : f32 to vector<64x128xf32>
    %7 = arith.maximumf %5, %6 : vector<64x128xf32>
    %c0_6 = arith.constant 0 : index
    %c0_7 = arith.constant 0 : index
    %8 = vector.load %arg4[%c0_6, %c0_7] : memref<64x128xf32, #tpu.memory_space<vmem>>, vector<64x128xf32>
    tpu.vector_store %arg4[%c0_6, %c0_7], %7 {strides = array<i32>} : memref<64x128xf32, #tpu.memory_space<vmem>>, vector<64x128xf32>,
    return
  }
  func.func @transform_0(%arg0: i32) -> (i32, i32) {
    %c0_i32 = arith.constant 0 : i32
    %c0_i32_0 = arith.constant 0 : i32
    %c0_i32_1 = arith.constant 0 : i32
    return %c0_i32, %c0_i32_0 : i32, i32
  }
  func.func @transform_1(%arg0: i32) -> (i32, i32) {
    %c0_i32 = arith.constant 0 : i32
    %c0_i32_0 = arith.constant 0 : i32
    %c0_i32_1 = arith.constant 0 : i32
    return %c0_i32, %c0_i32_0 : i32, i32
  }
  func.func @transform_2(%arg0: i32) -> (i32, i32) {
    %c0_i32 = arith.constant 0 : i32
    %c0_i32_0 = arith.constant 0 : i32
    return %c0_i32, %arg0 : i32, i32
  }
  func.func @transform_3(%arg0: i32) -> (i32, i32) {
    %c0_i32 = arith.constant 0 : i32
    %c0_i32_0 = arith.constant 0 : i32
    return %c0_i32, %arg0 : i32, i32
  }
}

</mosaic_0001>

<llo_original>
// kernel: learning_to_downsample.3
$region0: #{learning_to_downsample.3}
  #allocation0 [shape = 'u32[]', space=smem, size = 0x4, offset = 0x4, fixed_abs, tag = 'smem constant byte address 0x4 - core index']
  #allocation1 [shape = 'u32[144,128]{1,0:T(1,128)}', space=vmem, size = 0x12000, scoped, tag = 'internal scratch']
  %s0 = inlined_call_operand.vmem [shape: f32[32,36], index: 0, kind: input, shape index: {}]
  %s1 = inlined_call_operand.vmem [shape: f32[32,1], index: 1, kind: input, shape index: {}]
  %s2 = inlined_call_operand.vmem [shape: f32[36,128], index: 2, kind: input, shape index: {}]
  %s3 = inlined_call_operand.vmem [shape: f32[32,128], index: 3, kind: output, shape index: {}]
  %s4 = sld [smem:[#allocation0]]
  $region22: #{learning_to_downsample.3} parent=0
    _
  %s6 = ssub.s32 1, %s4
  %s7 = scalar_select 0, %s6, %s4
  // Predicated region
  $region2: #{learning_to_downsample.3} parent=0 // pred_check
    _
  $region3: #{learning_to_downsample.3} parent=0 // pred_check_branch
    %9 = sbr.rel (0) target = $region5
  $region4: #{learning_to_downsample.3} parent=0 // pred_region
    _
  $region5: #{learning_to_downsample.3} parent=0 // pred_fallthru
    _
  // Predicated region
  $region6: #{learning_to_downsample.3} parent=0 // pred_check
    _
  $region7: #{learning_to_downsample.3} parent=0 // pred_check_branch
    %11 = sbr.rel (0) target = $region9
  $region8: #{learning_to_downsample.3} parent=0 // pred_region
    _
  $region9: #{learning_to_downsample.3} parent=0 // pred_fallthru
    _
  // Predicated region
  $region10: #{learning_to_downsample.3} parent=0 // pred_check
    _
  $region11: #{learning_to_downsample.3} parent=0 // pred_check_branch
    %13 = sbr.rel (0) target = $region13
  $region12: #{learning_to_downsample.3} parent=0 // pred_region
    _
  $region13: #{learning_to_downsample.3} parent=0 // pred_fallthru
    _
  %v14 = vld [vmem:[%s0] sm:$0xff]
  %v15 = vld [vmem:[%s0 + $0x8] sm:$0xff]
  %v16 = vld [vmem:[%s0 + $0x10] sm:$0xff]
  %v17 = vld [vmem:[%s0 + $0x18] sm:$0xff]
  %v18 = vld [vmem:[%s2] sm:$0xff]
  %v19 = vld [vmem:[%s2 + $0x8] sm:$0xff]
  %v20 = vld [vmem:[%s2 + $0x10] sm:$0xff]
  %v21 = vld [vmem:[%s2 + $0x18] sm:$0xff]
  %v22 = vld [vmem:[%s2 + $0x20] sm:$0xf]
  %v23 = vld [vmem:[%s1] sm:$0xff]
  %v24 = vld [vmem:[%s1 + $0x8] sm:$0xff]
  %v25 = vld [vmem:[%s1 + $0x10] sm:$0xff]
  %v26 = vld [vmem:[%s1 + $0x18] sm:$0xff]
  %28 = vset.pattern.permute.xlu0 0
  %29 = vperm.xlu0 %28, %v23
  %v30 = vpop.permute.xlu0 %29
  %33 = vset.pattern.permute.xlu0 0
  %34 = vperm.xlu0 %33, %v24
  %v35 = vpop.permute.xlu0 %34
  %38 = vset.pattern.permute.xlu0 0
  %39 = vperm.xlu0 %38, %v25
  %v40 = vpop.permute.xlu0 %39
  %43 = vset.pattern.permute.xlu0 0
  %44 = vperm.xlu0 %43, %v26
  %v45 = vpop.permute.xlu0 %44
  %vm47 = vcmask 293888
  %v49 = vsel %vm47, %v14, 0
  %v52 = vsel %vm47, %v15, 0
  %v55 = vsel %vm47, %v16, 0
  %v58 = vsel %vm47, %v17, 0
  %vm60 = vcmask 1043456
  %v62 = vsel %vm60, %v22, 0
  %64 = vmatprep.subr.mxu0 0.0
  %65 = vmatpush1.msra.mxu0 %v18
  %66 = vmatprep.subr.mxu0 0.0
  %67 = vmatpush1.msra.mxu0 %v19
  %68 = vmatprep.subr.mxu0 0.0
  %69 = vmatpush1.msra.mxu0 %v20
  %70 = vmatprep.subr.mxu0 0.0
  %71 = vmatpush1.msra.mxu0 %v21
  %72 = vmatprep.subr.mxu0 0.0
  %73 = vmatpush1.msra.mxu0 %v62
  %74 = vmatprep.subr.mxu0 0.0
  %75 = vmatpush1.msra.mxu0 0.0
  %76 = vmatprep.subr.mxu0 0.0
  %77 = vmatpush1.msra.mxu0 0.0
  %78 = vmatprep.subr.mxu0 0.0
  %79 = vmatpush1.msra.mxu0 0.0
  %80 = vmatprep.subr.mxu0 0.0
  %81 = vmatpush1.msra.mxu0 0.0
  %82 = vmatprep.subr.mxu0 0.0
  %83 = vmatpush1.msra.mxu0 0.0
  %84 = vmatprep.subr.mxu0 0.0
  %85 = vmatpush1.msra.mxu0 0.0
  %86 = vmatprep.subr.mxu0 0.0
  %87 = vmatpush1.msra.mxu0 0.0
  %88 = vmatprep.subr.mxu0 0.0
  %89 = vmatpush1.msra.mxu0 0.0
  %90 = vmatprep.subr.mxu0 0.0
  %91 = vmatpush1.msra.mxu0 0.0
  %92 = vmatprep.subr.mxu0 0.0
  %93 = vmatpush1.msra.mxu0 0.0
  %94 = vmatprep.subr.mxu0 0.0
  %95 = vmatpush1.msra.mxu0 0.0
  %96 = vmatprep.subr.mxu0 0.0
  %97 = vmatpush1.msra.mxu0 0.0
  %98 = vmatprep.subr.mxu0 0.0
  %99 = vmatpush1.msra.mxu0 0.0
  %100 = vmatprep.subr.mxu0 0.0
  %101 = vmatpush1.msra.mxu0 0.0
  %102 = vmatprep.subr.mxu0 0.0
  %103 = vmatpush1.msra.mxu0 0.0
  %104 = vmatprep.subr.mxu0 0.0
  %105 = vmatpush1.msra.mxu0 0.0
  %106 = vmatprep.subr.mxu0 0.0
  %107 = vmatpush1.msra.mxu0 0.0
  %108 = vmatprep.subr.mxu0 0.0
  %109 = vmatpush1.msra.mxu0 0.0
  %110 = vmatprep.subr.mxu0 0.0
  %111 = vmatpush1.msra.mxu0 0.0
  %112 = vmatprep.subr.mxu0 0.0
  %113 = vmatpush1.msra.mxu0 0.0
  %114 = vmatprep.subr.mxu0 0.0
  %115 = vmatpush1.msra.mxu0 0.0
  %116 = vmatprep.subr.mxu0 0.0
  %117 = vmatpush1.msra.mxu0 0.0
  %118 = vmatprep.subr.mxu0 0.0
  %119 = vmatpush1.msra.mxu0 0.0
  %120 = vmatprep.subr.mxu0 0.0
  %121 = vmatpush1.msra.mxu0 0.0
  %122 = vmatprep.subr.mxu0 0.0
  %123 = vmatpush1.msra.mxu0 0.0
  %124 = vmatprep.subr.mxu0 0.0
  %125 = vmatpush1.msra.mxu0 0.0
  %126 = vmatprep.subr.mxu0 0.0
  %127 = vmatpush1.msra.mxu0 0.0
  %128 = vmatprep.mubr.f32.mxu0 0.0
  %129 = vmatmul.mubr.f32.gmra.mrb[0].mxu0 %v49
  %v130 = vpop.f32.mrb[0].mxu0
  %v131 = vadd.f32 %v30, %v130
  %v132 = vpop.f32.mrb[0].mxu0
  %133 = vmatprep.mubr.f32.mxu0 0.0
  %134 = vmatmul.mubr.f32.gmra.mrb[0].mxu0 %v52
  %v135 = vpop.f32.mrb[0].mxu0
  %v136 = vadd.f32 %v35, %v135
  %v137 = vpop.f32.mrb[0].mxu0
  %138 = vmatprep.mubr.f32.mxu0 0.0
  %139 = vmatmul.mubr.f32.gmra.mrb[0].mxu0 %v55
  %v140 = vpop.f32.mrb[0].mxu0
  %v141 = vadd.f32 %v40, %v140
  %v142 = vpop.f32.mrb[0].mxu0
  %143 = vmatprep.mubr.f32.mxu0 0.0
  %144 = vmatmul.mubr.f32.gmra.mrb[0].mxu0 %v58
  %v145 = vpop.f32.mrb[0].mxu0
  %v146 = vadd.f32 %v45, %v145
  %v147 = vpop.f32.mrb[0].mxu0
  %148 = vdwg.mxu0
  %v149 = vmax.f32 %v131, 0.0
  %v150 = vmax.f32 %v136, 0.0
  %v151 = vmax.f32 %v141, 0.0
  %v152 = vmax.f32 %v146, 0.0
  %153 = vst [vmem:[%s3] sm:$0xff] %v149
  %154 = vst [vmem:[%s3 + $0x8] sm:$0xff] %v150
  %155 = vst [vmem:[%s3 + $0x10] sm:$0xff] %v151
  %156 = vst [vmem:[%s3 + $0x18] sm:$0xff] %v152
  // Predicated region
  $region14: #{learning_to_downsample.3} parent=0 // pred_check
    _
  $region15: #{learning_to_downsample.3} parent=0 // pred_check_branch
    %158 = sbr.rel (0) target = $region17
  $region16: #{learning_to_downsample.3} parent=0 // pred_region
    _
  $region17: #{learning_to_downsample.3} parent=0 // pred_fallthru
    _
  // Predicated region
  $region18: #{learning_to_downsample.3} parent=0 // pred_check
    _
  $region19: #{learning_to_downsample.3} parent=0 // pred_check_branch
    %160 = sbr.rel (0) target = $region21
  $region20: #{learning_to_downsample.3} parent=0 // pred_region
    _
  $region21: #{learning_to_downsample.3} parent=0 // pred_fallthru
    _

// kernel: learning_to_downsample.4
$region0: #{learning_to_downsample.4}
  #allocation0 [shape = 'u32[]', space=smem, size = 0x4, offset = 0x4, fixed_abs, tag = 'smem constant byte address 0x4 - core index']
  #allocation1 [shape = 'u32[144,128]{1,0:T(1,128)}', space=vmem, size = 0x12000, scoped, tag = 'internal scratch']
  %s0 = inlined_call_operand.vmem [shape: f32[48,288], index: 0, kind: input, shape index: {}]
  %s1 = inlined_call_operand.vmem [shape: f32[48,1], index: 1, kind: input, shape index: {}]
  %s2 = inlined_call_operand.vmem [shape: f32[288,128], index: 2, kind: input, shape index: {}]
  %s3 = inlined_call_operand.vmem [shape: f32[48,128], index: 3, kind: output, shape index: {}]
  %s4 = sld [smem:[#allocation0]]
  $region22: #{learning_to_downsample.4} parent=0
    _
  %s6 = ssub.s32 1, %s4
  %s7 = scalar_select 0, %s6, %s4
  // Predicated region
  $region2: #{learning_to_downsample.4} parent=0 // pred_check
    _
  $region3: #{learning_to_downsample.4} parent=0 // pred_check_branch
    %9 = sbr.rel (0) target = $region5
  $region4: #{learning_to_downsample.4} parent=0 // pred_region
    _
  $region5: #{learning_to_downsample.4} parent=0 // pred_fallthru
    _
  // Predicated region
  $region6: #{learning_to_downsample.4} parent=0 // pred_check
    _
  $region7: #{learning_to_downsample.4} parent=0 // pred_check_branch
    %11 = sbr.rel (0) target = $region9
  $region8: #{learning_to_downsample.4} parent=0 // pred_region
    _
  $region9: #{learning_to_downsample.4} parent=0 // pred_fallthru
    _
  // Predicated region
  $region10: #{learning_to_downsample.4} parent=0 // pred_check
    _
  $region11: #{learning_to_downsample.4} parent=0 // pred_check_branch
    %13 = sbr.rel (0) target = $region13
  $region12: #{learning_to_downsample.4} parent=0 // pred_region
    _
  $region13: #{learning_to_downsample.4} parent=0 // pred_fallthru
    _
  %v14 = vld [vmem:[%s0] sm:$0xff]
  %v15 = vld [vmem:[%s0 + $0x8] sm:$0xff]
  %v16 = vld [vmem:[%s0 + $0x10] sm:$0xff]
  %v17 = vld [vmem:[%s0 + $0x18] sm:$0xff]
  %v18 = vld [vmem:[%s0 + $0x20] sm:$0xff]
  %v19 = vld [vmem:[%s0 + $0x28] sm:$0xff]
  %v20 = vld [vmem:[%s0 + $0x30] sm:$0xff]
  %v21 = vld [vmem:[%s0 + $0x38] sm:$0xff]
  %v22 = vld [vmem:[%s0 + $0x40] sm:$0xff]
  %v23 = vld [vmem:[%s0 + $0x48] sm:$0xff]
  %v24 = vld [vmem:[%s0 + $0x50] sm:$0xff]
  %v25 = vld [vmem:[%s0 + $0x58] sm:$0xff]
  %v26 = vld [vmem:[%s0 + $0x60] sm:$0xff]
  %v27 = vld [vmem:[%s0 + $0x68] sm:$0xff]
  %v28 = vld [vmem:[%s0 + $0x70] sm:$0xff]
  %v29 = vld [vmem:[%s0 + $0x78] sm:$0xff]
  %v30 = vld [vmem:[%s0 + $0x80] sm:$0xff]
  %v31 = vld [vmem:[%s0 + $0x88] sm:$0xff]
  %v32 = vld [vmem:[%s2] sm:$0xff]
  %v33 = vld [vmem:[%s2 + $0x8] sm:$0xff]
  %v34 = vld [vmem:[%s2 + $0x10] sm:$0xff]
  %v35 = vld [vmem:[%s2 + $0x18] sm:$0xff]
  %v36 = vld [vmem:[%s2 + $0x20] sm:$0xff]
  %v37 = vld [vmem:[%s2 + $0x28] sm:$0xff]
  %v38 = vld [vmem:[%s2 + $0x30] sm:$0xff]
  %v39 = vld [vmem:[%s2 + $0x38] sm:$0xff]
  %v40 = vld [vmem:[%s2 + $0x40] sm:$0xff]
  %v41 = vld [vmem:[%s2 + $0x48] sm:$0xff]
  %v42 = vld [vmem:[%s2 + $0x50] sm:$0xff]
  %v43 = vld [vmem:[%s2 + $0x58] sm:$0xff]
  %v44 = vld [vmem:[%s2 + $0x60] sm:$0xff]
  %v45 = vld [vmem:[%s2 + $0x68] sm:$0xff]
  %v46 = vld [vmem:[%s2 + $0x70] sm:$0xff]
  %v47 = vld [vmem:[%s2 + $0x78] sm:$0xff]
  %v48 = vld [vmem:[%s2 + $0x80] sm:$0xff]
  %v49 = vld [vmem:[%s2 + $0x88] sm:$0xff]
  %v50 = vld [vmem:[%s2 + $0x90] sm:$0xff]
  %v51 = vld [vmem:[%s2 + $0x98] sm:$0xff]
  %v52 = vld [vmem:[%s2 + $0xa0] sm:$0xff]
  %v53 = vld [vmem:[%s2 + $0xa8] sm:$0xff]
  %v54 = vld [vmem:[%s2 + $0xb0] sm:$0xff]
  %v55 = vld [vmem:[%s2 + $0xb8] sm:$0xff]
  %v56 = vld [vmem:[%s2 + $0xc0] sm:$0xff]
  %v57 = vld [vmem:[%s2 + $0xc8] sm:$0xff]
  %v58 = vld [vmem:[%s2 + $0xd0] sm:$0xff]
  %v59 = vld [vmem:[%s2 + $0xd8] sm:$0xff]
  %v60 = vld [vmem:[%s2 + $0xe0] sm:$0xff]
  %v61 = vld [vmem:[%s2 + $0xe8] sm:$0xff]
  %v62 = vld [vmem:[%s2 + $0xf0] sm:$0xff]
  %v63 = vld [vmem:[%s2 + $0xf8] sm:$0xff]
  %v64 = vld [vmem:[%s2 + $0x100] sm:$0xff]
  %v65 = vld [vmem:[%s2 + $0x108] sm:$0xff]
  %v66 = vld [vmem:[%s2 + $0x110] sm:$0xff]
  %v67 = vld [vmem:[%s2 + $0x118] sm:$0xff]
  %v68 = vld [vmem:[%s1] sm:$0xff]
  %v69 = vld [vmem:[%s1 + $0x8] sm:$0xff]
  %v70 = vld [vmem:[%s1 + $0x10] sm:$0xff]
  %v71 = vld [vmem:[%s1 + $0x18] sm:$0xff]
  %v72 = vld [vmem:[%s1 + $0x20] sm:$0xff]
  %v73 = vld [vmem:[%s1 + $0x28] sm:$0xff]
  %75 = vset.pattern.permute.xlu0 0
  %76 = vperm.xlu0 %75, %v68
  %v77 = vpop.permute.xlu0 %76
  %80 = vset.pattern.permute.xlu0 0
  %81 = vperm.xlu0 %80, %v69
  %v82 = vpop.permute.xlu0 %81
  %85 = vset.pattern.permute.xlu0 0
  %86 = vperm.xlu0 %85, %v70
  %v87 = vpop.permute.xlu0 %86
  %90 = vset.pattern.permute.xlu0 0
  %91 = vperm.xlu0 %90, %v71
  %v92 = vpop.permute.xlu0 %91
  %95 = vset.pattern.permute.xlu0 0
  %96 = vperm.xlu0 %95, %v72
  %v97 = vpop.permute.xlu0 %96
  %100 = vset.pattern.permute.xlu0 0
  %101 = vperm.xlu0 %100, %v73
  %v102 = vpop.permute.xlu0 %101
  %vm104 = vcmask 261120
  %v106 = vsel %vm104, %v16, 0
  %v109 = vsel %vm104, %v19, 0
  %v112 = vsel %vm104, %v22, 0
  %v115 = vsel %vm104, %v25, 0
  %v118 = vsel %vm104, %v28, 0
  %v121 = vsel %vm104, %v31, 0
  %123 = vmatprep.subr.mxu0 0.0
  %124 = vmatpush1.msra.mxu0 %v32
  %125 = vmatprep.subr.mxu0 0.0
  %126 = vmatpush1.msra.mxu0 %v33
  %127 = vmatprep.subr.mxu0 0.0
  %128 = vmatpush1.msra.mxu0 %v34
  %129 = vmatprep.subr.mxu0 0.0
  %130 = vmatpush1.msra.mxu0 %v35
  %131 = vmatprep.subr.mxu0 0.0
  %132 = vmatpush1.msra.mxu0 %v36
  %133 = vmatprep.subr.mxu0 0.0
  %134 = vmatpush1.msra.mxu0 %v37
  %135 = vmatprep.subr.mxu0 0.0
  %136 = vmatpush1.msra.mxu0 %v38
  %137 = vmatprep.subr.mxu0 0.0
  %138 = vmatpush1.msra.mxu0 %v39
  %139 = vmatprep.subr.mxu0 0.0
  %140 = vmatpush1.msra.mxu0 %v40
  %141 = vmatprep.subr.mxu0 0.0
  %142 = vmatpush1.msra.mxu0 %v41
  %143 = vmatprep.subr.mxu0 0.0
  %144 = vmatpush1.msra.mxu0 %v42
  %145 = vmatprep.subr.mxu0 0.0
  %146 = vmatpush1.msra.mxu0 %v43
  %147 = vmatprep.subr.mxu0 0.0
  %148 = vmatpush1.msra.mxu0 %v44
  %149 = vmatprep.subr.mxu0 0.0
  %150 = vmatpush1.msra.mxu0 %v45
  %151 = vmatprep.subr.mxu0 0.0
  %152 = vmatpush1.msra.mxu0 %v46
  %153 = vmatprep.subr.mxu0 0.0
  %154 = vmatpush1.msra.mxu0 %v47
  %155 = vmatprep.subr.mxu0 0.0
  %156 = vmatpush1.msra.mxu0 %v48
  %157 = vmatprep.subr.mxu0 0.0
  %158 = vmatpush1.msra.mxu0 %v49
  %159 = vmatprep.subr.mxu0 0.0
  %160 = vmatpush1.msra.mxu0 %v50
  %161 = vmatprep.subr.mxu0 0.0
  %162 = vmatpush1.msra.mxu0 %v51
  %163 = vmatprep.subr.mxu0 0.0
  %164 = vmatpush1.msra.mxu0 %v52
  %165 = vmatprep.subr.mxu0 0.0
  %166 = vmatpush1.msra.mxu0 %v53
  %167 = vmatprep.subr.mxu0 0.0
  %168 = vmatpush1.msra.mxu0 %v54
  %169 = vmatprep.subr.mxu0 0.0
  %170 = vmatpush1.msra.mxu0 %v55
  %171 = vmatprep.subr.mxu0 0.0
  %172 = vmatpush1.msra.mxu0 %v56
  %173 = vmatprep.subr.mxu0 0.0
  %174 = vmatpush1.msra.mxu0 %v57
  %175 = vmatprep.subr.mxu0 0.0
  %176 = vmatpush1.msra.mxu0 %v58
  %177 = vmatprep.subr.mxu0 0.0
  %178 = vmatpush1.msra.mxu0 %v59
  %179 = vmatprep.subr.mxu0 0.0
  %180 = vmatpush1.msra.mxu0 %v60
  %181 = vmatprep.subr.mxu0 0.0
  %182 = vmatpush1.msra.mxu0 %v61
  %183 = vmatprep.subr.mxu0 0.0
  %184 = vmatpush1.msra.mxu0 %v62
  %185 = vmatprep.subr.mxu0 0.0
  %186 = vmatpush1.msra.mxu0 %v63
  %187 = vmatprep.mubr.f32.mxu0 %v15
  %188 = vmatmul.mubr.f32.gmra.mrb[0].mxu0 %v14
  %v189 = vpop.f32.mrb[0].mxu0
  %v190 = vadd.f32 %v77, %v189
  %v191 = vpop.f32.mrb[0].mxu0
  %192 = vmatprep.mubr.f32.mxu0 %v18
  %193 = vmatmul.mubr.f32.gmra.mrb[0].mxu0 %v17
  %v194 = vpop.f32.mrb[0].mxu0
  %v195 = vadd.f32 %v82, %v194
  %v196 = vpop.f32.mrb[0].mxu0
  %197 = vmatprep.mubr.f32.mxu0 %v21
  %198 = vmatmul.mubr.f32.gmra.mrb[0].mxu0 %v20
  %v199 = vpop.f32.mrb[0].mxu0
  %v200 = vadd.f32 %v87, %v199
  %v201 = vpop.f32.mrb[0].mxu0
  %202 = vmatprep.mubr.f32.mxu0 %v24
  %203 = vmatmul.mubr.f32.gmra.mrb[0].mxu0 %v23
  %v204 = vpop.f32.mrb[0].mxu0
  %v205 = vadd.f32 %v92, %v204
  %v206 = vpop.f32.mrb[0].mxu0
  %207 = vmatprep.mubr.f32.mxu0 %v27
  %208 = vmatmul.mubr.f32.gmra.mrb[0].mxu0 %v26
  %v209 = vpop.f32.mrb[0].mxu0
  %v210 = vadd.f32 %v97, %v209
  %v211 = vpop.f32.mrb[0].mxu0
  %212 = vmatprep.mubr.f32.mxu0 %v30
  %213 = vmatmul.mubr.f32.gmra.mrb[0].mxu0 %v29
  %v214 = vpop.f32.mrb[0].mxu0
  %v215 = vadd.f32 %v102, %v214
  %v216 = vpop.f32.mrb[0].mxu0
  %217 = vdwg.mxu0
  %218 = vmatprep.subr.mxu0 0.0
  %219 = vmatpush1.msra.mxu0 %v64
  %220 = vmatprep.subr.mxu0 0.0
  %221 = vmatpush1.msra.mxu0 %v65
  %222 = vmatprep.subr.mxu0 0.0
  %223 = vmatpush1.msra.mxu0 %v66
  %224 = vmatprep.subr.mxu0 0.0
  %225 = vmatpush1.msra.mxu0 %v67
  %226 = vmatprep.subr.mxu0 0.0
  %227 = vmatpush1.msra.mxu0 0.0
  %228 = vmatprep.subr.mxu0 0.0
  %229 = vmatpush1.msra.mxu0 0.0
  %230 = vmatprep.subr.mxu0 0.0
  %231 = vmatpush1.msra.mxu0 0.0
  %232 = vmatprep.subr.mxu0 0.0
  %233 = vmatpush1.msra.mxu0 0.0
  %234 = vmatprep.subr.mxu0 0.0
  %235 = vmatpush1.msra.mxu0 0.0
  %236 = vmatprep.subr.mxu0 0.0
  %237 = vmatpush1.msra.mxu0 0.0
  %238 = vmatprep.subr.mxu0 0.0
  %239 = vmatpush1.msra.mxu0 0.0
  %240 = vmatprep.subr.mxu0 0.0
  %241 = vmatpush1.msra.mxu0 0.0
  %242 = vmatprep.subr.mxu0 0.0
  %243 = vmatpush1.msra.mxu0 0.0
  %244 = vmatprep.subr.mxu0 0.0
  %245 = vmatpush1.msra.mxu0 0.0
  %246 = vmatprep.subr.mxu0 0.0
  %247 = vmatpush1.msra.mxu0 0.0
  %248 = vmatprep.subr.mxu0 0.0
  %249 = vmatpush1.msra.mxu0 0.0
  %250 = vmatprep.subr.mxu0 0.0
  %251 = vmatpush1.msra.mxu0 0.0
  %252 = vmatprep.subr.mxu0 0.0
  %253 = vmatpush1.msra.mxu0 0.0
  %254 = vmatprep.subr.mxu0 0.0
  %255 = vmatpush1.msra.mxu0 0.0
  %256 = vmatprep.subr.mxu0 0.0
  %257 = vmatpush1.msra.mxu0 0.0
  %258 = vmatprep.subr.mxu0 0.0
  %259 = vmatpush1.msra.mxu0 0.0
  %260 = vmatprep.subr.mxu0 0.0
  %261 = vmatpush1.msra.mxu0 0.0
  %262 = vmatprep.subr.mxu0 0.0
  %263 = vmatpush1.msra.mxu0 0.0
  %264 = vmatprep.subr.mxu0 0.0
  %265 = vmatpush1.msra.mxu0 0.0
  %266 = vmatprep.subr.mxu0 0.0
  %267 = vmatpush1.msra.mxu0 0.0
  %268 = vmatprep.subr.mxu0 0.0
  %269 = vmatpush1.msra.mxu0 0.0
  %270 = vmatprep.subr.mxu0 0.0
  %271 = vmatpush1.msra.mxu0 0.0
  %272 = vmatprep.subr.mxu0 0.0
  %273 = vmatpush1.msra.mxu0 0.0
  %274 = vmatprep.subr.mxu0 0.0
  %275 = vmatpush1.msra.mxu0 0.0
  %276 = vmatprep.subr.mxu0 0.0
  %277 = vmatpush1.msra.mxu0 0.0
  %278 = vmatprep.subr.mxu0 0.0
  %279 = vmatpush1.msra.mxu0 0.0
  %280 = vmatprep.subr.mxu0 0.0
  %281 = vmatpush1.msra.mxu0 0.0
  %282 = vmatprep.mubr.f32.mxu0 0.0
  %283 = vmatmul.mubr.f32.gmra.mrb[0].mxu0 %v106
  %v284 = vpop.f32.mrb[0].mxu0
  %v285 = vadd.f32 %v190, %v284
  %v286 = vpop.f32.mrb[0].mxu0
  %287 = vmatprep.mubr.f32.mxu0 0.0
  %288 = vmatmul.mubr.f32.gmra.mrb[0].mxu0 %v109
  %v289 = vpop.f32.mrb[0].mxu0
  %v290 = vadd.f32 %v195, %v289
  %v291 = vpop.f32.mrb[0].mxu0
  %292 = vmatprep.mubr.f32.mxu0 0.0
  %293 = vmatmul.mubr.f32.gmra.mrb[0].mxu0 %v112
  %v294 = vpop.f32.mrb[0].mxu0
  %v295 = vadd.f32 %v200, %v294
  %v296 = vpop.f32.mrb[0].mxu0
  %297 = vmatprep.mubr.f32.mxu0 0.0
  %298 = vmatmul.mubr.f32.gmra.mrb[0].mxu0 %v115
  %v299 = vpop.f32.mrb[0].mxu0
  %v300 = vadd.f32 %v205, %v299
  %v301 = vpop.f32.mrb[0].mxu0
  %302 = vmatprep.mubr.f32.mxu0 0.0
  %303 = vmatmul.mubr.f32.gmra.mrb[0].mxu0 %v118
  %v304 = vpop.f32.mrb[0].mxu0
  %v305 = vadd.f32 %v210, %v304
  %v306 = vpop.f32.mrb[0].mxu0
  %307 = vmatprep.mubr.f32.mxu0 0.0
  %308 = vmatmul.mubr.f32.gmra.mrb[0].mxu0 %v121
  %v309 = vpop.f32.mrb[0].mxu0
  %v310 = vadd.f32 %v215, %v309
  %v311 = vpop.f32.mrb[0].mxu0
  %312 = vdwg.mxu0
  %v313 = vmax.f32 %v285, 0.0
  %v314 = vmax.f32 %v290, 0.0
  %v315 = vmax.f32 %v295, 0.0
  %v316 = vmax.f32 %v300, 0.0
  %v317 = vmax.f32 %v305, 0.0
  %v318 = vmax.f32 %v310, 0.0
  %319 = vst [vmem:[%s3] sm:$0xff] %v313
  %320 = vst [vmem:[%s3 + $0x8] sm:$0xff] %v314
  %321 = vst [vmem:[%s3 + $0x10] sm:$0xff] %v315
  %322 = vst [vmem:[%s3 + $0x18] sm:$0xff] %v316
  %323 = vst [vmem:[%s3 + $0x20] sm:$0xff] %v317
  %324 = vst [vmem:[%s3 + $0x28] sm:$0xff] %v318
  // Predicated region
  $region14: #{learning_to_downsample.4} parent=0 // pred_check
    _
  $region15: #{learning_to_downsample.4} parent=0 // pred_check_branch
    %326 = sbr.rel (0) target = $region17
  $region16: #{learning_to_downsample.4} parent=0 // pred_region
    _
  $region17: #{learning_to_downsample.4} parent=0 // pred_fallthru
    _
  // Predicated region
  $region18: #{learning_to_downsample.4} parent=0 // pred_check
    _
  $region19: #{learning_to_downsample.4} parent=0 // pred_check_branch
    %328 = sbr.rel (0) target = $region21
  $region20: #{learning_to_downsample.4} parent=0 // pred_region
    _
  $region21: #{learning_to_downsample.4} parent=0 // pred_fallthru
    _

// kernel: learning_to_downsample.5
$region0: #{learning_to_downsample.5}
  #allocation0 [shape = 'u32[]', space=smem, size = 0x4, offset = 0x4, fixed_abs, tag = 'smem constant byte address 0x4 - core index']
  #allocation1 [shape = 'u32[144,128]{1,0:T(1,128)}', space=vmem, size = 0x12000, scoped, tag = 'internal scratch']
  %s0 = inlined_call_operand.vmem [shape: f32[64,432], index: 0, kind: input, shape index: {}]
  %s1 = inlined_call_operand.vmem [shape: f32[64,1], index: 1, kind: input, shape index: {}]
  %s2 = inlined_call_operand.vmem [shape: f32[432,128], index: 2, kind: input, shape index: {}]
  %s3 = inlined_call_operand.vmem [shape: f32[64,128], index: 3, kind: output, shape index: {}]
  %s4 = sld [smem:[#allocation0]]
  $region22: #{learning_to_downsample.5} parent=0
    _
  %s6 = ssub.s32 1, %s4
  %s7 = scalar_select 0, %s6, %s4
  // Predicated region
  $region2: #{learning_to_downsample.5} parent=0 // pred_check
    _
  $region3: #{learning_to_downsample.5} parent=0 // pred_check_branch
    %9 = sbr.rel (0) target = $region5
  $region4: #{learning_to_downsample.5} parent=0 // pred_region
    _
  $region5: #{learning_to_downsample.5} parent=0 // pred_fallthru
    _
  // Predicated region
  $region6: #{learning_to_downsample.5} parent=0 // pred_check
    _
  $region7: #{learning_to_downsample.5} parent=0 // pred_check_branch
    %11 = sbr.rel (0) target = $region9
  $region8: #{learning_to_downsample.5} parent=0 // pred_region
    _
  $region9: #{learning_to_downsample.5} parent=0 // pred_fallthru
    _
  // Predicated region
  $region10: #{learning_to_downsample.5} parent=0 // pred_check
    _
  $region11: #{learning_to_downsample.5} parent=0 // pred_check_branch
    %13 = sbr.rel (0) target = $region13
  $region12: #{learning_to_downsample.5} parent=0 // pred_region
    _
  $region13: #{learning_to_downsample.5} parent=0 // pred_fallthru
    _
  %v14 = vld [vmem:[%s0] sm:$0xff]
  %v15 = vld [vmem:[%s0 + $0x8] sm:$0xff]
  %v16 = vld [vmem:[%s0 + $0x10] sm:$0xff]
  %v17 = vld [vmem:[%s0 + $0x18] sm:$0xff]
  %v18 = vld [vmem:[%s0 + $0x20] sm:$0xff]
  %v19 = vld [vmem:[%s0 + $0x28] sm:$0xff]
  %v20 = vld [vmem:[%s0 + $0x30] sm:$0xff]
  %v21 = vld [vmem:[%s0 + $0x38] sm:$0xff]
  %v22 = vld [vmem:[%s0 + $0x40] sm:$0xff]
  %v23 = vld [vmem:[%s0 + $0x48] sm:$0xff]
  %v24 = vld [vmem:[%s0 + $0x50] sm:$0xff]
  %v25 = vld [vmem:[%s0 + $0x58] sm:$0xff]
  %v26 = vld [vmem:[%s0 + $0x60] sm:$0xff]
  %v27 = vld [vmem:[%s0 + $0x68] sm:$0xff]
  %v28 = vld [vmem:[%s0 + $0x70] sm:$0xff]
  %v29 = vld [vmem:[%s0 + $0x78] sm:$0xff]
  %v30 = vld [vmem:[%s0 + $0x80] sm:$0xff]
  %v31 = vld [vmem:[%s0 + $0x88] sm:$0xff]
  %v32 = vld [vmem:[%s0 + $0x90] sm:$0xff]
  %v33 = vld [vmem:[%s0 + $0x98] sm:$0xff]
  %v34 = vld [vmem:[%s0 + $0xa0] sm:$0xff]
  %v35 = vld [vmem:[%s0 + $0xa8] sm:$0xff]
  %v36 = vld [vmem:[%s0 + $0xb0] sm:$0xff]
  %v37 = vld [vmem:[%s0 + $0xb8] sm:$0xff]
  %v38 = vld [vmem:[%s0 + $0xc0] sm:$0xff]
  %v39 = vld [vmem:[%s0 + $0xc8] sm:$0xff]
  %v40 = vld [vmem:[%s0 + $0xd0] sm:$0xff]
  %v41 = vld [vmem:[%s0 + $0xd8] sm:$0xff]
  %v42 = vld [vmem:[%s0 + $0xe0] sm:$0xff]
  %v43 = vld [vmem:[%s0 + $0xe8] sm:$0xff]
  %v44 = vld [vmem:[%s0 + $0xf0] sm:$0xff]
  %v45 = vld [vmem:[%s0 + $0xf8] sm:$0xff]
  %v46 = vld [vmem:[%s2] sm:$0xff]
  %v47 = vld [vmem:[%s2 + $0x8] sm:$0xff]
  %v48 = vld [vmem:[%s2 + $0x10] sm:$0xff]
  %v49 = vld [vmem:[%s2 + $0x18] sm:$0xff]
  %v50 = vld [vmem:[%s2 + $0x20] sm:$0xff]
  %v51 = vld [vmem:[%s2 + $0x28] sm:$0xff]
  %v52 = vld [vmem:[%s2 + $0x30] sm:$0xff]
  %v53 = vld [vmem:[%s2 + $0x38] sm:$0xff]
  %v54 = vld [vmem:[%s2 + $0x40] sm:$0xff]
  %v55 = vld [vmem:[%s2 + $0x48] sm:$0xff]
  %v56 = vld [vmem:[%s2 + $0x50] sm:$0xff]
  %v57 = vld [vmem:[%s2 + $0x58] sm:$0xff]
  %v58 = vld [vmem:[%s2 + $0x60] sm:$0xff]
  %v59 = vld [vmem:[%s2 + $0x68] sm:$0xff]
  %v60 = vld [vmem:[%s2 + $0x70] sm:$0xff]
  %v61 = vld [vmem:[%s2 + $0x78] sm:$0xff]
  %v62 = vld [vmem:[%s2 + $0x80] sm:$0xff]
  %v63 = vld [vmem:[%s2 + $0x88] sm:$0xff]
  %v64 = vld [vmem:[%s2 + $0x90] sm:$0xff]
  %v65 = vld [vmem:[%s2 + $0x98] sm:$0xff]
  %v66 = vld [vmem:[%s2 + $0xa0] sm:$0xff]
  %v67 = vld [vmem:[%s2 + $0xa8] sm:$0xff]
  %v68 = vld [vmem:[%s2 + $0xb0] sm:$0xff]
  %v69 = vld [vmem:[%s2 + $0xb8] sm:$0xff]
  %v70 = vld [vmem:[%s2 + $0xc0] sm:$0xff]
  %v71 = vld [vmem:[%s2 + $0xc8] sm:$0xff]
  %v72 = vld [vmem:[%s2 + $0xd0] sm:$0xff]
  %v73 = vld [vmem:[%s2 + $0xd8] sm:$0xff]
  %v74 = vld [vmem:[%s2 + $0xe0] sm:$0xff]
  %v75 = vld [vmem:[%s2 + $0xe8] sm:$0xff]
  %v76 = vld [vmem:[%s2 + $0xf0] sm:$0xff]
  %v77 = vld [vmem:[%s2 + $0xf8] sm:$0xff]
  %v78 = vld [vmem:[%s2 + $0x100] sm:$0xff]
  %v79 = vld [vmem:[%s2 + $0x108] sm:$0xff]
  %v80 = vld [vmem:[%s2 + $0x110] sm:$0xff]
  %v81 = vld [vmem:[%s2 + $0x118] sm:$0xff]
  %v82 = vld [vmem:[%s2 + $0x120] sm:$0xff]
  %v83 = vld [vmem:[%s2 + $0x128] sm:$0xff]
  %v84 = vld [vmem:[%s2 + $0x130] sm:$0xff]
  %v85 = vld [vmem:[%s2 + $0x138] sm:$0xff]
  %v86 = vld [vmem:[%s2 + $0x140] sm:$0xff]
  %v87 = vld [vmem:[%s2 + $0x148] sm:$0xff]
  %v88 = vld [vmem:[%s2 + $0x150] sm:$0xff]
  %v89 = vld [vmem:[%s2 + $0x158] sm:$0xff]
  %v90 = vld [vmem:[%s2 + $0x160] sm:$0xff]
  %v91 = vld [vmem:[%s2 + $0x168] sm:$0xff]
  %v92 = vld [vmem:[%s2 + $0x170] sm:$0xff]
  %v93 = vld [vmem:[%s2 + $0x178] sm:$0xff]
  %v94 = vld [vmem:[%s2 + $0x180] sm:$0xff]
  %v95 = vld [vmem:[%s2 + $0x188] sm:$0xff]
  %v96 = vld [vmem:[%s2 + $0x190] sm:$0xff]
  %v97 = vld [vmem:[%s2 + $0x198] sm:$0xff]
  %v98 = vld [vmem:[%s2 + $0x1a0] sm:$0xff]
  %v99 = vld [vmem:[%s2 + $0x1a8] sm:$0xff]
  %v100 = vld [vmem:[%s1] sm:$0xff]
  %v101 = vld [vmem:[%s1 + $0x8] sm:$0xff]
  %v102 = vld [vmem:[%s1 + $0x10] sm:$0xff]
  %v103 = vld [vmem:[%s1 + $0x18] sm:$0xff]
  %v104 = vld [vmem:[%s1 + $0x20] sm:$0xff]
  %v105 = vld [vmem:[%s1 + $0x28] sm:$0xff]
  %v106 = vld [vmem:[%s1 + $0x30] sm:$0xff]
  %v107 = vld [vmem:[%s1 + $0x38] sm:$0xff]
  %109 = vset.pattern.permute.xlu0 0
  %110 = vperm.xlu0 %109, %v100
  %v111 = vpop.permute.xlu0 %110
  %114 = vset.pattern.permute.xlu0 0
  %115 = vperm.xlu0 %114, %v101
  %v116 = vpop.permute.xlu0 %115
  %119 = vset.pattern.permute.xlu0 0
  %120 = vperm.xlu0 %119, %v102
  %v121 = vpop.permute.xlu0 %120
  %124 = vset.pattern.permute.xlu0 0
  %125 = vperm.xlu0 %124, %v103
  %v126 = vpop.permute.xlu0 %125
  %129 = vset.pattern.permute.xlu0 0
  %130 = vperm.xlu0 %129, %v104
  %v131 = vpop.permute.xlu0 %130
  %134 = vset.pattern.permute.xlu0 0
  %135 = vperm.xlu0 %134, %v105
  %v136 = vpop.permute.xlu0 %135
  %139 = vset.pattern.permute.xlu0 0
  %140 = vperm.xlu0 %139, %v106
  %v141 = vpop.permute.xlu0 %140
  %144 = vset.pattern.permute.xlu0 0
  %145 = vperm.xlu0 %144, %v107
  %v146 = vpop.permute.xlu0 %145
  %vm148 = vcmask 392192
  %v150 = vsel %vm148, %v17, 0
  %v153 = vsel %vm148, %v21, 0
  %v156 = vsel %vm148, %v25, 0
  %v159 = vsel %vm148, %v29, 0
  %v162 = vsel %vm148, %v33, 0
  %v165 = vsel %vm148, %v37, 0
  %v168 = vsel %vm148, %v41, 0
  %v171 = vsel %vm148, %v45, 0
  %173 = vmatprep.subr.mxu0 0.0
  %174 = vmatpush1.msra.mxu0 %v46
  %175 = vmatprep.subr.mxu0 0.0
  %176 = vmatpush1.msra.mxu0 %v47
  %177 = vmatprep.subr.mxu0 0.0
  %178 = vmatpush1.msra.mxu0 %v48
  %179 = vmatprep.subr.mxu0 0.0
  %180 = vmatpush1.msra.mxu0 %v49
  %181 = vmatprep.subr.mxu0 0.0
  %182 = vmatpush1.msra.mxu0 %v50
  %183 = vmatprep.subr.mxu0 0.0
  %184 = vmatpush1.msra.mxu0 %v51
  %185 = vmatprep.subr.mxu0 0.0
  %186 = vmatpush1.msra.mxu0 %v52
  %187 = vmatprep.subr.mxu0 0.0
  %188 = vmatpush1.msra.mxu0 %v53
  %189 = vmatprep.subr.mxu0 0.0
  %190 = vmatpush1.msra.mxu0 %v54
  %191 = vmatprep.subr.mxu0 0.0
  %192 = vmatpush1.msra.mxu0 %v55
  %193 = vmatprep.subr.mxu0 0.0
  %194 = vmatpush1.msra.mxu0 %v56
  %195 = vmatprep.subr.mxu0 0.0
  %196 = vmatpush1.msra.mxu0 %v57
  %197 = vmatprep.subr.mxu0 0.0
  %198 = vmatpush1.msra.mxu0 %v58
  %199 = vmatprep.subr.mxu0 0.0
  %200 = vmatpush1.msra.mxu0 %v59
  %201 = vmatprep.subr.mxu0 0.0
  %202 = vmatpush1.msra.mxu0 %v60
  %203 = vmatprep.subr.mxu0 0.0
  %204 = vmatpush1.msra.mxu0 %v61
  %205 = vmatprep.subr.mxu0 0.0
  %206 = vmatpush1.msra.mxu0 %v62
  %207 = vmatprep.subr.mxu0 0.0
  %208 = vmatpush1.msra.mxu0 %v63
  %209 = vmatprep.subr.mxu0 0.0
  %210 = vmatpush1.msra.mxu0 %v64
  %211 = vmatprep.subr.mxu0 0.0
  %212 = vmatpush1.msra.mxu0 %v65
  %213 = vmatprep.subr.mxu0 0.0
  %214 = vmatpush1.msra.mxu0 %v66
  %215 = vmatprep.subr.mxu0 0.0
  %216 = vmatpush1.msra.mxu0 %v67
  %217 = vmatprep.subr.mxu0 0.0
  %218 = vmatpush1.msra.mxu0 %v68
  %219 = vmatprep.subr.mxu0 0.0
  %220 = vmatpush1.msra.mxu0 %v69
  %221 = vmatprep.subr.mxu0 0.0
  %222 = vmatpush1.msra.mxu0 %v70
  %223 = vmatprep.subr.mxu0 0.0
  %224 = vmatpush1.msra.mxu0 %v71
  %225 = vmatprep.subr.mxu0 0.0
  %226 = vmatpush1.msra.mxu0 %v72
  %227 = vmatprep.subr.mxu0 0.0
  %228 = vmatpush1.msra.mxu0 %v73
  %229 = vmatprep.subr.mxu0 0.0
  %230 = vmatpush1.msra.mxu0 %v74
  %231 = vmatprep.subr.mxu0 0.0
  %232 = vmatpush1.msra.mxu0 %v75
  %233 = vmatprep.subr.mxu0 0.0
  %234 = vmatpush1.msra.mxu0 %v76
  %235 = vmatprep.subr.mxu0 0.0
  %236 = vmatpush1.msra.mxu0 %v77
  %237 = vmatprep.mubr.f32.mxu0 %v15
  %238 = vmatmul.mubr.f32.gmra.mrb[0].mxu0 %v14
  %v239 = vpop.f32.mrb[0].mxu0
  %v240 = vadd.f32 %v111, %v239
  %v241 = vpop.f32.mrb[0].mxu0
  %242 = vmatprep.mubr.f32.mxu0 %v19
  %243 = vmatmul.mubr.f32.gmra.mrb[0].mxu0 %v18
  %v244 = vpop.f32.mrb[0].mxu0
  %v245 = vadd.f32 %v116, %v244
  %v246 = vpop.f32.mrb[0].mxu0
  %247 = vmatprep.mubr.f32.mxu0 %v23
  %248 = vmatmul.mubr.f32.gmra.mrb[0].mxu0 %v22
  %v249 = vpop.f32.mrb[0].mxu0
  %v250 = vadd.f32 %v121, %v249
  %v251 = vpop.f32.mrb[0].mxu0
  %252 = vmatprep.mubr.f32.mxu0 %v27
  %253 = vmatmul.mubr.f32.gmra.mrb[0].mxu0 %v26
  %v254 = vpop.f32.mrb[0].mxu0
  %v255 = vadd.f32 %v126, %v254
  %v256 = vpop.f32.mrb[0].mxu0
  %257 = vmatprep.mubr.f32.mxu0 %v31
  %258 = vmatmul.mubr.f32.gmra.mrb[0].mxu0 %v30
  %v259 = vpop.f32.mrb[0].mxu0
  %v260 = vadd.f32 %v131, %v259
  %v261 = vpop.f32.mrb[0].mxu0
  %262 = vmatprep.mubr.f32.mxu0 %v35
  %263 = vmatmul.mubr.f32.gmra.mrb[0].mxu0 %v34
  %v264 = vpop.f32.mrb[0].mxu0
  %v265 = vadd.f32 %v136, %v264
  %v266 = vpop.f32.mrb[0].mxu0
  %267 = vmatprep.mubr.f32.mxu0 %v39
  %268 = vmatmul.mubr.f32.gmra.mrb[0].mxu0 %v38
  %v269 = vpop.f32.mrb[0].mxu0
  %v270 = vadd.f32 %v141, %v269
  %v271 = vpop.f32.mrb[0].mxu0
  %272 = vmatprep.mubr.f32.mxu0 %v43
  %273 = vmatmul.mubr.f32.gmra.mrb[0].mxu0 %v42
  %v274 = vpop.f32.mrb[0].mxu0
  %v275 = vadd.f32 %v146, %v274
  %v276 = vpop.f32.mrb[0].mxu0
  %277 = vdwg.mxu0
  %278 = vmatprep.subr.mxu0 0.0
  %279 = vmatpush1.msra.mxu0 %v78
  %280 = vmatprep.subr.mxu0 0.0
  %281 = vmatpush1.msra.mxu0 %v79
  %282 = vmatprep.subr.mxu0 0.0
  %283 = vmatpush1.msra.mxu0 %v80
  %284 = vmatprep.subr.mxu0 0.0
  %285 = vmatpush1.msra.mxu0 %v81
  %286 = vmatprep.subr.mxu0 0.0
  %287 = vmatpush1.msra.mxu0 %v82
  %288 = vmatprep.subr.mxu0 0.0
  %289 = vmatpush1.msra.mxu0 %v83
  %290 = vmatprep.subr.mxu0 0.0
  %291 = vmatpush1.msra.mxu0 %v84
  %292 = vmatprep.subr.mxu0 0.0
  %293 = vmatpush1.msra.mxu0 %v85
  %294 = vmatprep.subr.mxu0 0.0
  %295 = vmatpush1.msra.mxu0 %v86
  %296 = vmatprep.subr.mxu0 0.0
  %297 = vmatpush1.msra.mxu0 %v87
  %298 = vmatprep.subr.mxu0 0.0
  %299 = vmatpush1.msra.mxu0 %v88
  %300 = vmatprep.subr.mxu0 0.0
  %301 = vmatpush1.msra.mxu0 %v89
  %302 = vmatprep.subr.mxu0 0.0
  %303 = vmatpush1.msra.mxu0 %v90
  %304 = vmatprep.subr.mxu0 0.0
  %305 = vmatpush1.msra.mxu0 %v91
  %306 = vmatprep.subr.mxu0 0.0
  %307 = vmatpush1.msra.mxu0 %v92
  %308 = vmatprep.subr.mxu0 0.0
  %309 = vmatpush1.msra.mxu0 %v93
  %310 = vmatprep.subr.mxu0 0.0
  %311 = vmatpush1.msra.mxu0 %v94
  %312 = vmatprep.subr.mxu0 0.0
  %313 = vmatpush1.msra.mxu0 %v95
  %314 = vmatprep.subr.mxu0 0.0
  %315 = vmatpush1.msra.mxu0 %v96
  %316 = vmatprep.subr.mxu0 0.0
  %317 = vmatpush1.msra.mxu0 %v97
  %318 = vmatprep.subr.mxu0 0.0
  %319 = vmatpush1.msra.mxu0 %v98
  %320 = vmatprep.subr.mxu0 0.0
  %321 = vmatpush1.msra.mxu0 %v99
  %322 = vmatprep.subr.mxu0 0.0
  %323 = vmatpush1.msra.mxu0 0.0
  %324 = vmatprep.subr.mxu0 0.0
  %325 = vmatpush1.msra.mxu0 0.0
  %326 = vmatprep.subr.mxu0 0.0
  %327 = vmatpush1.msra.mxu0 0.0
  %328 = vmatprep.subr.mxu0 0.0
  %329 = vmatpush1.msra.mxu0 0.0
  %330 = vmatprep.subr.mxu0 0.0
  %331 = vmatpush1.msra.mxu0 0.0
  %332 = vmatprep.subr.mxu0 0.0
  %333 = vmatpush1.msra.mxu0 0.0
  %334 = vmatprep.subr.mxu0 0.0
  %335 = vmatpush1.msra.mxu0 0.0
  %336 = vmatprep.subr.mxu0 0.0
  %337 = vmatpush1.msra.mxu0 0.0
  %338 = vmatprep.subr.mxu0 0.0
  %339 = vmatpush1.msra.mxu0 0.0
  %340 = vmatprep.subr.mxu0 0.0
  %341 = vmatpush1.msra.mxu0 0.0
  %342 = vmatprep.mubr.f32.mxu0 %v150
  %343 = vmatmul.mubr.f32.gmra.mrb[0].mxu0 %v16
  %v344 = vpop.f32.mrb[0].mxu0
  %v345 = vadd.f32 %v240, %v344
  %v346 = vpop.f32.mrb[0].mxu0
  %347 = vmatprep.mubr.f32.mxu0 %v153
  %348 = vmatmul.mubr.f32.gmra.mrb[0].mxu0 %v20
  %v349 = vpop.f32.mrb[0].mxu0
  %v350 = vadd.f32 %v245, %v349
  %v351 = vpop.f32.mrb[0].mxu0
  %352 = vmatprep.mubr.f32.mxu0 %v156
  %353 = vmatmul.mubr.f32.gmra.mrb[0].mxu0 %v24
  %v354 = vpop.f32.mrb[0].mxu0
  %v355 = vadd.f32 %v250, %v354
  %v356 = vpop.f32.mrb[0].mxu0
  %357 = vmatprep.mubr.f32.mxu0 %v159
  %358 = vmatmul.mubr.f32.gmra.mrb[0].mxu0 %v28
  %v359 = vpop.f32.mrb[0].mxu0
  %v360 = vadd.f32 %v255, %v359
  %v361 = vpop.f32.mrb[0].mxu0
  %362 = vmatprep.mubr.f32.mxu0 %v162
  %363 = vmatmul.mubr.f32.gmra.mrb[0].mxu0 %v32
  %v364 = vpop.f32.mrb[0].mxu0
  %v365 = vadd.f32 %v260, %v364
  %v366 = vpop.f32.mrb[0].mxu0
  %367 = vmatprep.mubr.f32.mxu0 %v165
  %368 = vmatmul.mubr.f32.gmra.mrb[0].mxu0 %v36
  %v369 = vpop.f32.mrb[0].mxu0
  %v370 = vadd.f32 %v265, %v369
  %v371 = vpop.f32.mrb[0].mxu0
  %372 = vmatprep.mubr.f32.mxu0 %v168
  %373 = vmatmul.mubr.f32.gmra.mrb[0].mxu0 %v40
  %v374 = vpop.f32.mrb[0].mxu0
  %v375 = vadd.f32 %v270, %v374
  %v376 = vpop.f32.mrb[0].mxu0
  %377 = vmatprep.mubr.f32.mxu0 %v171
  %378 = vmatmul.mubr.f32.gmra.mrb[0].mxu0 %v44
  %v379 = vpop.f32.mrb[0].mxu0
  %v380 = vadd.f32 %v275, %v379
  %v381 = vpop.f32.mrb[0].mxu0
  %382 = vdwg.mxu0
  %v383 = vmax.f32 %v345, 0.0
  %v384 = vmax.f32 %v350, 0.0
  %v385 = vmax.f32 %v355, 0.0
  %v386 = vmax.f32 %v360, 0.0
  %v387 = vmax.f32 %v365, 0.0
  %v388 = vmax.f32 %v370, 0.0
  %v389 = vmax.f32 %v375, 0.0
  %v390 = vmax.f32 %v380, 0.0
  %391 = vst [vmem:[%s3] sm:$0xff] %v383
  %392 = vst [vmem:[%s3 + $0x8] sm:$0xff] %v384
  %393 = vst [vmem:[%s3 + $0x10] sm:$0xff] %v385
  %394 = vst [vmem:[%s3 + $0x18] sm:$0xff] %v386
  %395 = vst [vmem:[%s3 + $0x20] sm:$0xff] %v387
  %396 = vst [vmem:[%s3 + $0x28] sm:$0xff] %v388
  %397 = vst [vmem:[%s3 + $0x30] sm:$0xff] %v389
  %398 = vst [vmem:[%s3 + $0x38] sm:$0xff] %v390
  // Predicated region
  $region14: #{learning_to_downsample.5} parent=0 // pred_check
    _
  $region15: #{learning_to_downsample.5} parent=0 // pred_check_branch
    %400 = sbr.rel (0) target = $region17
  $region16: #{learning_to_downsample.5} parent=0 // pred_region
    _
  $region17: #{learning_to_downsample.5} parent=0 // pred_fallthru
    _
  // Predicated region
  $region18: #{learning_to_downsample.5} parent=0 // pred_check
    _
  $region19: #{learning_to_downsample.5} parent=0 // pred_check_branch
    %402 = sbr.rel (0) target = $region21
  $region20: #{learning_to_downsample.5} parent=0 // pred_region
    _
  $region21: #{learning_to_downsample.5} parent=0 // pred_fallthru
    _

</llo_original>
